<compile_context>
chip_gen: v5e
topology: v5e:2x2
jax: 0.10.0
libtpu: 0.0.40
codegen_flags: <defaults>
</compile_context>

<pallas_src>
import jax
import jax.numpy as jnp
from jax.experimental import pallas as pl
from jax.experimental.pallas import tpu as pltpu


# ---------------------------------------------------------------------------
# Phase 1: per-block partial statistics (per-channel sum / sum-of-squares)
# ---------------------------------------------------------------------------
def _partial_stats_kernel(x_ref, sum_ref, sumsq_ref):
    # x_ref:              (n_tile, C, hw_tile) tile of activations
    # sum_ref/sumsq_ref:  (1, 1, C, 1) f32 partials for this grid block
    x = x_ref[...].astype(jnp.float32)
    s = jnp.sum(x, axis=(0, 2), keepdims=True)        # (1, C, 1), lane reduce on XLU
    ss = jnp.sum(x * x, axis=(0, 2), keepdims=True)   # (1, C, 1)
    sum_ref[...] = s[None]                             # (1, 1, C, 1)
    sumsq_ref[...] = ss[None]


# ---------------------------------------------------------------------------
# Phase 2: elementwise normalize  y = x * (gamma / sd_x)
# ---------------------------------------------------------------------------
def _normalize_kernel(x_ref, scale_ref, y_ref):
    # x_ref/y_ref: (n_tile, C, hw_tile);  scale_ref: (C, 1) in x's dtype.
    # Single vmul per element; no upcast (bf16-native on v6e/v7x).
    y_ref[...] = (x_ref[...] * scale_ref[...]).astype(y_ref.dtype)


# ---------------------------------------------------------------------------
# Block / VMEM budgeting
# ---------------------------------------------------------------------------
def _tpu_budget():
    """Per-generation x-block target and scoped-VMEM limit (dtype-agnostic bytes)."""
    vmem_bytes = 64 << 20                       # conservative default (v7x per-TC)
    try:
        info = pltpu.get_tpu_info()
        vmem_bytes = int(getattr(info, "vmem_capacity_bytes", vmem_bytes))
    except Exception:
        pass
    if vmem_bytes >= (96 << 20):                # v5e / v6e: 128 MiB physical
        target = 8 << 20
    else:                                       # v7x: 64 MiB per TensorCore
        target = 4 << 20
    # phase 2 keeps ~4 blocks live (double-buffered in + out); leave headroom
    limit = int(min(vmem_bytes * 3 // 4, 8 * target))
    return target, limit


def _choose_block(n, c, hw, itemsize, target_bytes):
    """Pick (n_tile, hw_tile): lane-dense hw tile (multiple of 128 dividing HW,
    or full HW when ragged), then grow along N up to ~target_bytes per block."""
    if hw % 128 == 0:
        max_elems = max(target_bytes // itemsize, 128 * c)
        max_lanes = max(128, (max_elems // max(c, 1)) // 128 * 128)
        hw_tile = min(hw, max_lanes)
        while hw % hw_tile != 0:
            hw_tile -= 128
        hw_tile = max(hw_tile, 128)
    else:
        hw_tile = hw                            # full-extent block is always legal
    n_tile = 1
    if hw_tile == hw:                           # whole image per step: block over N too
        block_bytes = max(c * hw * itemsize, 1)
        n_tile = max(1, min(n, target_bytes // block_bytes))
        while n % n_tile != 0:
            n_tile -= 1
    return n_tile, hw_tile


# ---------------------------------------------------------------------------
# Forward wrapper
# ---------------------------------------------------------------------------
def bf_batchnorm_forward(x_nchw, gammas, running_sd, *, training=True,
                         eps=1e-5, momentum=0.1):
    """BF_batchNorm forward.

    Args:
      x_nchw:     (N, C, H, W)
      gammas:     (1, C, 1, 1)
      running_sd: (1, C, 1, 1)
    Returns:
      y_nchw:         (N, C, H, W)
      new_running_sd: (1, C, 1, 1)  (unchanged in eval mode)
    """
    N, C, H, W = x_nchw.shape
    HW = H * W
    x3d = x_nchw.reshape(N, C, HW)                      # free reshape, no transpose
    gamma = gammas.reshape(C).astype(jnp.float32)
    rsd = running_sd.reshape(C).astype(jnp.float32)
    itemsize = jnp.dtype(x_nchw.dtype).itemsize

    target_bytes, vmem_limit = _tpu_budget()
    n_tile, hw_tile = _choose_block(N, C, HW, itemsize, target_bytes)
    grid = (N // n_tile, HW // hw_tile)

    x_spec = pl.BlockSpec((n_tile, C, hw_tile), lambda i, j: (i, 0, j))
    scale_spec = pl.BlockSpec((C, 1), lambda i, j: (0, 0))
    x_bytes = N * C * HW * itemsize

    if training:
        # Per-grid-block partials -> both axes "parallel" (v7x megacore-shardable).
        part_spec = pl.BlockSpec((1, 1, C, 1), lambda i, j: (i, j, 0, 0))
        part_shape = jax.ShapeDtypeStruct((grid[0], grid[1], C, 1), jnp.float32)
        psum, psq = pl.pallas_call(
            _partial_stats_kernel,
            out_shape=(part_shape, part_shape),
            grid=grid,
            in_specs=[x_spec],
            out_specs=(part_spec, part_spec),
            compiler_params=pltpu.CompilerParams(
                dimension_semantics=("parallel", "parallel"),
                vmem_limit_bytes=vmem_limit),
            cost_estimate=pl.CostEstimate(
                flops=3 * N * C * HW, transcendentals=0, bytes_accessed=x_bytes),
        )(x3d)

        # Tiny C-length finalize in exact f32 JAX (exact sqrt, no EUP approx drift).
        count = float(N * HW)
        tot = jnp.sum(psum, axis=(0, 1))[:, 0]           # (C,)
        tot_sq = jnp.sum(psq, axis=(0, 1))[:, 0]         # (C,)
        mean = tot / count
        var = jnp.maximum(tot_sq / count - mean * mean, 0.0)   # biased (unbiased=False)
        sd = jnp.sqrt(var + eps)
        scale = gamma / sd
        new_running_sd = ((1.0 - momentum) * rsd + momentum * sd
                          ).reshape(1, C, 1, 1).astype(running_sd.dtype)
    else:
        # eval mode: divide by the stored running_sd; buffer unchanged
        scale = gamma / rsd
        new_running_sd = running_sd

    # Multiply in the input dtype (bf16-native when x is bf16).
    scale2d = scale.reshape(C, 1).astype(x_nchw.dtype)

    y3d = pl.pallas_call(
        _normalize_kernel,
        out_shape=jax.ShapeDtypeStruct((N, C, HW), x_nchw.dtype),
        grid=grid,
        in_specs=[x_spec, scale_spec],
        out_specs=x_spec,
        compiler_params=pltpu.CompilerParams(
            dimension_semantics=("parallel", "parallel"),
            vmem_limit_bytes=vmem_limit),
        cost_estimate=pl.CostEstimate(
            flops=N * C * HW, transcendentals=0, bytes_accessed=2 * x_bytes),
    )(x3d, scale2d)

    return y3d.reshape(N, C, H, W), new_running_sd


# ---------------------------------------------------------------------------
# Reference + self-test
# ---------------------------------------------------------------------------
def _reference_forward(x, gammas, running_sd):
    # pure-JAX reference (training-mode semantics)
    var = jnp.var(x, axis=(0, 2, 3), keepdims=True)
    sd = jnp.sqrt(var + 1e-5)
    y = (x / sd) * gammas
    new_rsd = 0.9 * running_sd + 0.1 * sd
    return y, new_rsd


if __name__ == "__main__":
    key = jax.random.PRNGKey(0)
    kx, kg, kx2 = jax.random.split(key, 3)

    N, C, H, W = 2, 4, 16, 16

    # deterministic init mirroring the module's __init__:
    #   running_sd = ones(1, C, 1, 1)
    #   gammas     = clamp(randn(1, C, 1, 1) * (2/9/64), -0.025, 0.025)
    running_sd = jnp.ones((1, C, 1, 1), jnp.float32)
    gammas = jnp.clip(
        jax.random.normal(kg, (1, C, 1, 1), jnp.float32) * (2.0 / 9.0 / 64.0),
        -0.025, 0.025)

    x = jax.random.normal(kx, (N, C, H, W), jnp.float32) * 1.7 + 0.3

    # training mode
    y, new_rsd = bf_batchnorm_forward(x, gammas, running_sd, training=True)
    jax.block_until_ready((y, new_rsd))
    y_ref, new_rsd_ref = _reference_forward(x, gammas, running_sd)
    assert jnp.allclose(y, y_ref, atol=1e-5, rtol=2e-5), "output mismatch"
    assert jnp.allclose(new_rsd, new_rsd_ref, atol=1e-5, rtol=1e-5), "running_sd mismatch"

    # eval mode: divide by running_sd, buffer unchanged
    y_eval, rsd_eval = bf_batchnorm_forward(x, gammas, running_sd, training=False)
    jax.block_until_ready((y_eval, rsd_eval))
    y_eval_ref = (x / running_sd) * gammas
    assert jnp.allclose(y_eval, y_eval_ref, atol=1e-5, rtol=2e-5), "eval output mismatch"

    # ragged H*W path (HW not a multiple of 128 -> full-extent lane block + N blocking)
    N2, C2, H2, W2 = 3, 8, 7, 7
    rsd2 = jnp.ones((1, C2, 1, 1), jnp.float32)
    g2 = jnp.clip(
        jax.random.normal(kg, (1, C2, 1, 1), jnp.float32) * (2.0 / 9.0 / 64.0),
        -0.025, 0.025)
    x2 = jax.random.normal(kx2, (N2, C2, H2, W2), jnp.float32) * 0.8 - 0.2
    y2, new_rsd2 = bf_batchnorm_forward(x2, g2, rsd2, training=True)
    jax.block_until_ready((y2, new_rsd2))
    y2_ref, new_rsd2_ref = _reference_forward(x2, g2, rsd2)
    assert jnp.allclose(y2, y2_ref, atol=1e-5, rtol=2e-5), "ragged output mismatch"
    assert jnp.allclose(new_rsd2, new_rsd2_ref, atol=1e-5, rtol=1e-5), "ragged running_sd mismatch"

    print("KERNEL_OK")
</pallas_src>

<mosaic_0001>
module attributes {stable_mosaic.version = 11 : i64} {
  func.func @_partial_stats_kernel(%arg0: i32, %arg1: i32, %arg2: memref<2x4x256xf32, #tpu.memory_space<vmem>>, %arg3: memref<1x1x4x1xf32, #tpu.memory_space<vmem>>, %arg4: memref<1x1x4x1xf32, #tpu.memory_space<vmem>>) attributes {dimension_semantics = [#tpu.dimension_semantics<parallel>, #tpu.dimension_semantics<parallel>], iteration_bounds = array<i64: 1, 1>, scalar_prefetch = 0 : i64, scratch_operands = 0 : i64, tpu.core_type = #tpu.core_type<tc>, window_params = [{transform_indices = @transform_0, window_bounds = array<i64: 2, 4, 256>}, {transform_indices = @transform_1, window_bounds = array<i64: 1, 1, 4, 1>}, {transform_indices = @transform_2, window_bounds = array<i64: 1, 1, 4, 1>}]} {
    %c0 = arith.constant 0 : index
    %c0_0 = arith.constant 0 : index
    %c0_1 = arith.constant 0 : index
    %0 = vector.load %arg2[%c0, %c0_0, %c0_1] : memref<2x4x256xf32, #tpu.memory_space<vmem>>, vector<2x4x256xf32>
    %cst = arith.constant dense<0.000000e+00> : vector<4xf32>
    %1 = vector.multi_reduction <add>, %0, %cst [0, 2] : vector<2x4x256xf32> to vector<4xf32>
    %2 = vector.shape_cast %1 : vector<4xf32> to vector<1x4x1xf32>
    %3 = arith.mulf %0, %0 : vector<2x4x256xf32>
    %cst_2 = arith.constant dense<0.000000e+00> : vector<4xf32>
    %4 = vector.multi_reduction <add>, %3, %cst_2 [0, 2] : vector<2x4x256xf32> to vector<4xf32>
    %5 = vector.shape_cast %4 : vector<4xf32> to vector<1x4x1xf32>
    %6 = vector.shape_cast %2 : vector<1x4x1xf32> to vector<1x1x4x1xf32>
    %c0_3 = arith.constant 0 : index
    %c0_4 = arith.constant 0 : index
    %c0_5 = arith.constant 0 : index
    %c0_6 = arith.constant 0 : index
    %7 = vector.load %arg3[%c0_3, %c0_4, %c0_5, %c0_6] : memref<1x1x4x1xf32, #tpu.memory_space<vmem>>, vector<1x1x4x1xf32>
    tpu.vector_store %arg3[%c0_3, %c0_4, %c0_5, %c0_6], %6 {strides = array<i32>} : memref<1x1x4x1xf32, #tpu.memory_space<vmem>>, vector<1x1x4x1xf32>,
    %8 = vector.shape_cast %5 : vector<1x4x1xf32> to vector<1x1x4x1xf32>
    %c0_7 = arith.constant 0 : index
    %c0_8 = arith.constant 0 : index
    %c0_9 = arith.constant 0 : index
    %c0_10 = arith.constant 0 : index
    %9 = vector.load %arg4[%c0_7, %c0_8, %c0_9, %c0_10] : memref<1x1x4x1xf32, #tpu.memory_space<vmem>>, vector<1x1x4x1xf32>
    tpu.vector_store %arg4[%c0_7, %c0_8, %c0_9, %c0_10], %8 {strides = array<i32>} : memref<1x1x4x1xf32, #tpu.memory_space<vmem>>, vector<1x1x4x1xf32>,
    return
  }
  func.func @transform_0(%arg0: i32, %arg1: i32) -> (i32, i32, i32) {
    %c0_i32 = arith.constant 0 : i32
    %c0_i32_0 = arith.constant 0 : i32
    return %arg0, %c0_i32, %arg1 : i32, i32, i32
  }
  func.func @transform_1(%arg0: i32, %arg1: i32) -> (i32, i32, i32, i32) {
    %c0_i32 = arith.constant 0 : i32
    %c0_i32_0 = arith.constant 0 : i32
    %c0_i32_1 = arith.constant 0 : i32
    return %arg0, %arg1, %c0_i32, %c0_i32_0 : i32, i32, i32, i32
  }
  func.func @transform_2(%arg0: i32, %arg1: i32) -> (i32, i32, i32, i32) {
    %c0_i32 = arith.constant 0 : i32
    %c0_i32_0 = arith.constant 0 : i32
    %c0_i32_1 = arith.constant 0 : i32
    return %arg0, %arg1, %c0_i32, %c0_i32_0 : i32, i32, i32, i32
  }
}

</mosaic_0001>

<llo_original>
// kernel: tpu_custom_call.1
$region0: #{tpu_custom_call.1}
  #allocation0 [shape = 'u32[]', space=smem, size = 0x4, offset = 0x4, fixed_abs, tag = 'smem constant byte address 0x4 - core index']
  #allocation1 [shape = 'u32[72,128]{1,0:T(1,128)}', space=vmem, size = 0x9000, scoped, tag = 'internal scratch']
  %s0 = inlined_call_operand.hbm [shape: f32[2,4,256], index: 0, kind: input, shape index: {}]
  %s1 = inlined_call_operand.vmem [shape: f32[1,1,4,1], index: 1, kind: output, shape index: {0}]
  %s2 = inlined_call_operand.vmem [shape: f32[1,1,4,1], index: 2, kind: output, shape index: {1}]
  %3 = xla_tuple %s1, %s2
  %s4 = sld [smem:[#allocation0]]
  $region26: #{tpu_custom_call.1} parent=0
    _
  %s6 = ssub.s32 1, %s4
  %s7 = scalar_select 0, %s6, %s4
  $region1: #{tpu_custom_call.1} parent=0
    #allocation2 [shape = 'u8[8192]{0}', space=vmem, size = 0x2000, scoped, tag = 'input window, operand 0, single buffered']
    #allocation3 [shape = 's32[1]{0}', space=sflag, size = 0x4, scoped, tag = 'scoped memory for tpu_custom_call.1']
    %8 = vsyncpa [#allocation3], 0
    // Predicated region
    $region2: #{tpu_custom_call.1} parent=1 // pred_check
      _
    $region3: #{tpu_custom_call.1} parent=1 // pred_check_branch
      %10 = sbr.rel (0) target = $region5
    $region4: #{tpu_custom_call.1} parent=1 // pred_region
      %12 = vsyncadd [#allocation3], 0
      %s13 = sshll.u32 %s0, 4
      %s14 = int_to_ptr.hbm [resolvable:$true] %s13
      %s15 = sshll.u32 [#allocation2], 4
      %s16 = int_to_ptr.vmem [resolvable:$true] %s15
      %21 = dma.hbm_to_vmem [thread:$0]  %s14, 256, %s16, [#allocation3], 128, 128, 8
    $region5: #{tpu_custom_call.1} parent=1 // pred_fallthru
      _
    // Predicated region
    $region6: #{tpu_custom_call.1} parent=1 // pred_check
      _
    $region7: #{tpu_custom_call.1} parent=1 // pred_check_branch
      %23 = sbr.rel (0) target = $region9
    $region8: #{tpu_custom_call.1} parent=1 // pred_region
      %25 = dma.done [#allocation3], 256
    $region9: #{tpu_custom_call.1} parent=1 // pred_fallthru
      _
    %v26 = vld [vmem:[#allocation2] sm:$0xff]
    %v27 = vld [vmem:[#allocation2 + $0x8] sm:$0xff]
    %30 = vst [vmem:[#allocation1] ss:$2 sm:$0xff] %v26
    %v31 = vld.sshfl [vmem:[#allocation1] sm:$0xff pattern:$0x75316420]
    %v32 = vld.sshfl [vmem:[#allocation1 + $0x8] sm:$0xff pattern:$0x75316420]
    %s33 = scalar_lea.vmem [#allocation1], 16
    %34 = vst [vmem:[%s33] ss:$2 sm:$0xff] %v27
    %v35 = vld.sshfl [vmem:[#allocation1 + $0x10] sm:$0xff pattern:$0x75316420]
    %v36 = vld.sshfl [vmem:[#allocation1 + $0x18] sm:$0xff pattern:$0x75316420]
    %vm41 = vcmask 1043456
    %v42 = vsel %vm41, %v31, 0.0
    %v43 = vsel %vm41, %v32, 0.0
    %v44 = vadd.f32 %v42, %v43
    %v45 = vsel %vm41, %v35, 0.0
    %v46 = vadd.f32 %v44, %v45
    %v47 = vsel %vm41, %v36, 0.0
    %v48 = vadd.f32 %v46, %v47
    %49 = vadd.xlane.f32.xlu0 %v48
    %v50 = vpop.xlane.xlu0 %49
    %v51 = vmul.f32 %v26, %v26
    %v52 = vmul.f32 %v27, %v27
    %55 = vst [vmem:[#allocation1] ss:$2 sm:$0xff] %v51
    %v56 = vld.sshfl [vmem:[#allocation1] sm:$0xff pattern:$0x75316420]
    %v57 = vld.sshfl [vmem:[#allocation1 + $0x8] sm:$0xff pattern:$0x75316420]
    %s58 = scalar_lea.vmem [#allocation1], 16
    %59 = vst [vmem:[%s58] ss:$2 sm:$0xff] %v52
    %v60 = vld.sshfl [vmem:[#allocation1 + $0x10] sm:$0xff pattern:$0x75316420]
    %v61 = vld.sshfl [vmem:[#allocation1 + $0x18] sm:$0xff pattern:$0x75316420]
    %v66 = vsel %vm41, %v56, 0.0
    %v67 = vsel %vm41, %v57, 0.0
    %v68 = vadd.f32 %v66, %v67
    %v69 = vsel %vm41, %v60, 0.0
    %v70 = vadd.f32 %v68, %v69
    %v71 = vsel %vm41, %v61, 0.0
    %v72 = vadd.f32 %v70, %v71
    %73 = vadd.xlane.f32.xlu0 %v72
    %v74 = vpop.xlane.xlu0 %73
    %vm75 = vcmask 3072
    %76 = vst.msk [vmem:[%s1] sm:$0xf] %vm75, %v50
    %77 = vst.msk [vmem:[%s2] sm:$0xf] %vm75, %v74
    // Predicated region
    $region10: #{tpu_custom_call.1} parent=1 // pred_check
      _
    $region11: #{tpu_custom_call.1} parent=1 // pred_check_branch
      %79 = sbr.rel (0) target = $region13
    $region12: #{tpu_custom_call.1} parent=1 // pred_region
      _
    $region13: #{tpu_custom_call.1} parent=1 // pred_fallthru
      _
    // Predicated region
    $region14: #{tpu_custom_call.1} parent=1 // pred_check
      _
    $region15: #{tpu_custom_call.1} parent=1 // pred_check_branch
      %81 = sbr.rel (0) target = $region17
    $region16: #{tpu_custom_call.1} parent=1 // pred_region
      _
    $region17: #{tpu_custom_call.1} parent=1 // pred_fallthru
      _
    // Predicated region
    $region18: #{tpu_custom_call.1} parent=1 // pred_check
      _
    $region19: #{tpu_custom_call.1} parent=1 // pred_check_branch
      %83 = sbr.rel (0) target = $region21
    $region20: #{tpu_custom_call.1} parent=1 // pred_region
      _
    $region21: #{tpu_custom_call.1} parent=1 // pred_fallthru
      _
    // Predicated region
    $region22: #{tpu_custom_call.1} parent=1 // pred_check
      _
    $region23: #{tpu_custom_call.1} parent=1 // pred_check_branch
      %85 = sbr.rel (0) target = $region25
    $region24: #{tpu_custom_call.1} parent=1 // pred_region
      _
    $region25: #{tpu_custom_call.1} parent=1 // pred_fallthru
      _
    %86 = vsyncpa [#allocation3], 1

</llo_original>
